<compile_context>
chip_gen: v7x
topology: tpu7x:2x2x1
jax: 0.10.0
libtpu: 0.0.40
codegen_flags: <defaults>
</compile_context>

<pallas_src>
import jax
import jax.numpy as jnp
from jax.experimental import pallas as pl
from jax.experimental.pallas import tpu as pltpu

# ------------------------- model configuration ------------------------------
N, C, H, W = 2, 4, 16, 16          # batch, channels, spatial (small shapes)
NUM_UPSTREAM = 3                   # number of upstream tensors t[i]
CTOT = NUM_UPSTREAM * C            # 12  stacked upstream channels
KTOT = 9 * CTOT                    # 108 im2col contraction width (sublane dim)
M = N * H * W                      # 512 flattened output positions (lane dim)
CO = 3 * C                         # 12  total output channels (3 blocks x C)
CO_PAD = 16                        # padded to 2 full f32 sublane tiles

# Deterministic "wiring" (mirrors Layer.wire / Layer.connections):
CONNECTIONS = {"1": [0, 1], "2": [1, 2], "3": [0, 2]}


# ------------------------------ Pallas kernel --------------------------------
def _layer_kernel(p_ref, w_ref, b_ref, o_ref):
    """Whole layer in one matmul: conv-as-matmul (transposed) -> bias -> ReLU.

    p_ref: (KTOT, M)     shared im2col slab of all 3 upstream tensors
    w_ref: (CO_PAD, KTOT) scalar-folded, block-stacked conv weights
    b_ref: (CO_PAD, 1)   block-stacked conv biases (broadcast along lanes)
    o_ref: (CO_PAD, M)   transposed outputs of all 3 blocks (lane-dense)
    """
    y = jnp.dot(w_ref[...], p_ref[...], preferred_element_type=jnp.float32)
    o_ref[...] = jnp.maximum(y + b_ref[...], 0.0).astype(o_ref.dtype)


def fused_layer_call(patches_t, w_all, b_all):
    """patches_t (KTOT, M), w_all (CO_PAD, KTOT), b_all (CO_PAD, 1) -> (CO_PAD, M)."""
    return pl.pallas_call(
        _layer_kernel,
        out_shape=jax.ShapeDtypeStruct((CO_PAD, M), jnp.float32),
        grid=(1,),
        in_specs=[
            pl.BlockSpec((KTOT, M), lambda i: (0, 0)),
            pl.BlockSpec((CO_PAD, KTOT), lambda i: (0, 0)),
            pl.BlockSpec((CO_PAD, 1), lambda i: (0, 0)),
        ],
        out_specs=pl.BlockSpec((CO_PAD, M), lambda i: (0, 0)),
        compiler_params=pltpu.CompilerParams(
            dimension_semantics=("arbitrary",)),
    )(patches_t, w_all, b_all)


# ------------------------------ JAX glue --------------------------------------
def im2col_T(t_stack):
    """(U, N, C, H, W) -> (9*U*C, N*H*W), row order (dy, dx, upstream, cin), SAME pad."""
    x = jnp.transpose(t_stack, (0, 2, 1, 3, 4)).reshape(CTOT, N, H, W)  # (U*C, N, H, W)
    xp = jnp.pad(x, ((0, 0), (0, 0), (1, 1), (1, 1)))
    cols = [xp[:, :, dy:dy + H, dx:dx + W].reshape(CTOT, M)
            for dy in range(3) for dx in range(3)]
    return jnp.concatenate(cols, axis=0)                                # (KTOT, M)


def build_weight_and_bias(params):
    """Fold connection scalars into a single block-stacked weight / bias."""
    w_rows, b_rows = [], []
    for b in ("1", "2", "3"):
        wb = params["blocks"][b]["w"]                      # (Cout, Cin, 3, 3) OIHW
        w_perm = jnp.transpose(wb, (0, 2, 3, 1))           # (Cout, ky, kx, Cin)
        scales = jnp.stack([
            params["scalars"][b + str(i)] if i in CONNECTIONS[b]
            else jnp.zeros((), jnp.float32)
            for i in range(NUM_UPSTREAM)])                 # (U,)
        # (Cout, ky, kx, U, Cin) -> flatten (ky, kx, U, Cin) to match patch rows
        eff = w_perm[:, :, :, None, :] * scales[None, None, None, :, None]
        w_rows.append(eff.reshape(C, KTOT))                # (C, KTOT)
        b_rows.append(params["blocks"][b]["b"])            # (C,)
    w_all = jnp.concatenate(w_rows, axis=0)                # (CO, KTOT)
    b_all = jnp.concatenate(b_rows, axis=0)                # (CO,)
    w_all = jnp.pad(w_all, ((0, CO_PAD - CO), (0, 0)))     # (CO_PAD, KTOT)
    b_all = jnp.pad(b_all, ((0, CO_PAD - CO),))[:, None]   # (CO_PAD, 1)
    return w_all, b_all


@jax.jit
def layer_forward(t_stack, params):
    """t_stack: (NUM_UPSTREAM, N, C, H, W) NCHW.  Returns list of 3 NCHW outputs."""
    patches_t = im2col_T(t_stack)                           # (KTOT, M)
    w_all, b_all = build_weight_and_bias(params)            # (CO_PAD, KTOT), (CO_PAD, 1)
    y = fused_layer_call(patches_t, w_all, b_all)[:CO]      # (CO, M)
    outs = [jnp.transpose(y[k * C:(k + 1) * C].reshape(C, N, H, W), (1, 0, 2, 3))
            for k in range(3)]
    return outs


def ref_layer_forward(t_stack, params):
    """Pure-JAX reference (matches PyTorch semantics of the assumed Block)."""
    outs = []
    for b in ("1", "2", "3"):
        conn = CONNECTIONS[b]
        x = sum(params["scalars"][b + str(i)] * t_stack[i] for i in conn)
        y = jax.lax.conv_general_dilated(
            x, params["blocks"][b]["w"], (1, 1), "SAME",
            dimension_numbers=("NCHW", "OIHW", "NCHW"))
        outs.append(jax.nn.relu(y + params["blocks"][b]["b"][None, :, None, None]))
    return outs


def init_params(key):
    params = {"blocks": {}, "scalars": {}}
    for b in ("1", "2", "3"):
        key, kw, kb = jax.random.split(key, 3)
        params["blocks"][b] = {
            "w": jax.random.normal(kw, (C, C, 3, 3), jnp.float32) * 0.1,
            "b": jax.random.normal(kb, (C,), jnp.float32) * 0.1,
        }
        for i in CONNECTIONS[b]:
            key, ks = jax.random.split(key)
            params["scalars"][b + str(i)] = jax.random.uniform(ks, (), jnp.float32)
    return params


# ------------------------------- main ------------------------------------------
if __name__ == "__main__":
    key = jax.random.PRNGKey(0)
    key, kx = jax.random.split(key)
    t_stack = jax.random.normal(kx, (NUM_UPSTREAM, N, C, H, W), jnp.float32)
    params = init_params(key)

    outs = layer_forward(t_stack, params)
    outs = [jax.block_until_ready(o) for o in outs]

    refs = ref_layer_forward(t_stack, params)
    for o, r in zip(outs, refs):
        assert o.shape == (N, C, H, W)
        assert jnp.allclose(o, r, atol=1e-5, rtol=1e-5), "mismatch vs reference"

    print("KERNEL_OK")
</pallas_src>

<mosaic_0001>
module attributes {stable_mosaic.version = 11 : i64} {
  func.func @_layer_kernel(%arg0: i32, %arg1: memref<108x512xf32, #tpu.memory_space<vmem>>, %arg2: memref<16x108xf32, #tpu.memory_space<vmem>>, %arg3: memref<16x1xf32, #tpu.memory_space<vmem>>, %arg4: memref<16x512xf32, #tpu.memory_space<vmem>>) attributes {dimension_semantics = [#tpu.dimension_semantics<arbitrary>], iteration_bounds = array<i64: 1>, scalar_prefetch = 0 : i64, scratch_operands = 0 : i64, tpu.core_type = #tpu.core_type<tc>, window_params = [{pipeline_mode = #tpu.pipeline_mode<synchronous>, transform_indices = @transform_0, window_bounds = array<i64: 108, 512>}, {pipeline_mode = #tpu.pipeline_mode<synchronous>, transform_indices = @transform_1, window_bounds = array<i64: 16, 108>}, {pipeline_mode = #tpu.pipeline_mode<synchronous>, transform_indices = @transform_2, window_bounds = array<i64: 16, 1>}, {pipeline_mode = #tpu.pipeline_mode<synchronous>, transform_indices = @transform_3, window_bounds = array<i64: 16, 512>}]} {
    %c0 = arith.constant 0 : index
    %c0_0 = arith.constant 0 : index
    %0 = vector.load %arg2[%c0, %c0_0] : memref<16x108xf32, #tpu.memory_space<vmem>>, vector<16x108xf32>
    %c0_1 = arith.constant 0 : index
    %c0_2 = arith.constant 0 : index
    %1 = vector.load %arg1[%c0_1, %c0_2] : memref<108x512xf32, #tpu.memory_space<vmem>>, vector<108x512xf32>
    %cst = arith.constant dense<0.000000e+00> : vector<16x512xf32>
    %2 = tpu.matmul %0, %1, %cst {dimension_numbers = #tpu.dot_dimension_numbers<[1], [0], [0], [1], [0, 0, 1, 1], [], []>} : vector<16x108xf32>, vector<108x512xf32>, vector<16x512xf32> -> vector<16x512xf32>
    %c0_3 = arith.constant 0 : index
    %c0_4 = arith.constant 0 : index
    %3 = vector.load %arg3[%c0_3, %c0_4] : memref<16x1xf32, #tpu.memory_space<vmem>>, vector<16x1xf32>
    %4 = vector.broadcast %3 : vector<16x1xf32> to vector<16x512xf32>
    %5 = arith.addf %2, %4 : vector<16x512xf32>
    %cst_5 = arith.constant 0.000000e+00 : f32
    %6 = vector.broadcast %cst_5 : f32 to vector<16x512xf32>
    %7 = arith.maximumf %5, %6 : vector<16x512xf32>
    %c0_6 = arith.constant 0 : index
    %c0_7 = arith.constant 0 : index
    %8 = vector.load %arg4[%c0_6, %c0_7] : memref<16x512xf32, #tpu.memory_space<vmem>>, vector<16x512xf32>
    tpu.vector_store %arg4[%c0_6, %c0_7], %7 {strides = array<i32>} : memref<16x512xf32, #tpu.memory_space<vmem>>, vector<16x512xf32>,
    return
  }
  func.func @transform_0(%arg0: i32) -> (i32, i32) {
    %c0_i32 = arith.constant 0 : i32
    %c0_i32_0 = arith.constant 0 : i32
    %c0_i32_1 = arith.constant 0 : i32
    return %c0_i32, %c0_i32_0 : i32, i32
  }
  func.func @transform_1(%arg0: i32) -> (i32, i32) {
    %c0_i32 = arith.constant 0 : i32
    %c0_i32_0 = arith.constant 0 : i32
    %c0_i32_1 = arith.constant 0 : i32
    return %c0_i32, %c0_i32_0 : i32, i32
  }
  func.func @transform_2(%arg0: i32) -> (i32, i32) {
    %c0_i32 = arith.constant 0 : i32
    %c0_i32_0 = arith.constant 0 : i32
    %c0_i32_1 = arith.constant 0 : i32
    return %c0_i32, %c0_i32_0 : i32, i32
  }
  func.func @transform_3(%arg0: i32) -> (i32, i32) {
    %c0_i32 = arith.constant 0 : i32
    %c0_i32_0 = arith.constant 0 : i32
    %c0_i32_1 = arith.constant 0 : i32
    return %c0_i32, %c0_i32_0 : i32, i32
  }
}

</mosaic_0001>

<llo_original>
// kernel: layer_forward.1
$region0: #{layer_forward.1}
  #allocation0 [shape = 'u32[]', space=smem, size = 0x4, offset = 0x4, fixed_abs, tag = 'smem constant byte address 0x4 - core index']
  #allocation1 [shape = 'u32[144,128]{1,0:T(1,128)}', space=vmem, size = 0x12000, scoped, tag = 'internal scratch']
  %s0 = inlined_call_operand.vmem [shape: f32[108,512], index: 0, kind: input, shape index: {}]
  %s1 = inlined_call_operand.vmem [shape: f32[16,108], index: 1, kind: input, shape index: {}]
  %s2 = inlined_call_operand.vmem [shape: f32[16,1], index: 2, kind: input, shape index: {}]
  %s3 = inlined_call_operand.vmem [shape: f32[16,512], index: 3, kind: output, shape index: {}]
  %s4 = sld [smem:[#allocation0]]
  $region22: #{layer_forward.1} parent=0
    _
  %s6 = ssub.s32 1, %s4
  %s7 = scalar_select 0, %s6, %s4
  // Predicated region
  $region2: #{layer_forward.1} parent=0 // pred_check
    _
  $region3: #{layer_forward.1} parent=0 // pred_check_branch
    %9 = sbr.rel (0) target = $region5
  $region4: #{layer_forward.1} parent=0 // pred_region
    _
  $region5: #{layer_forward.1} parent=0 // pred_fallthru
    _
  // Predicated region
  $region6: #{layer_forward.1} parent=0 // pred_check
    _
  $region7: #{layer_forward.1} parent=0 // pred_check_branch
    %11 = sbr.rel (0) target = $region9
  $region8: #{layer_forward.1} parent=0 // pred_region
    _
  $region9: #{layer_forward.1} parent=0 // pred_fallthru
    _
  // Predicated region
  $region10: #{layer_forward.1} parent=0 // pred_check
    _
  $region11: #{layer_forward.1} parent=0 // pred_check_branch
    %13 = sbr.rel (0) target = $region13
  $region12: #{layer_forward.1} parent=0 // pred_region
    _
  $region13: #{layer_forward.1} parent=0 // pred_fallthru
    _
  %v14 = vld [vmem:[%s1] sm:$0xff]
  %v15 = vld [vmem:[%s1 + $0x8] sm:$0xff]
  %v16 = vld [vmem:[%s0] sm:$0xff]
  %v17 = vld [vmem:[%s0 + $0x8] sm:$0xff]
  %v18 = vld [vmem:[%s0 + $0x10] sm:$0xff]
  %v19 = vld [vmem:[%s0 + $0x18] sm:$0xff]
  %v20 = vld [vmem:[%s0 + $0x20] sm:$0xff]
  %v21 = vld [vmem:[%s0 + $0x28] sm:$0xff]
  %v22 = vld [vmem:[%s0 + $0x30] sm:$0xff]
  %v23 = vld [vmem:[%s0 + $0x38] sm:$0xff]
  %v24 = vld [vmem:[%s0 + $0x40] sm:$0xff]
  %v25 = vld [vmem:[%s0 + $0x48] sm:$0xff]
  %v26 = vld [vmem:[%s0 + $0x50] sm:$0xff]
  %v27 = vld [vmem:[%s0 + $0x58] sm:$0xff]
  %v28 = vld [vmem:[%s0 + $0x60] sm:$0xff]
  %v29 = vld [vmem:[%s0 + $0x68] sm:$0xff]
  %v30 = vld [vmem:[%s0 + $0x70] sm:$0xff]
  %v31 = vld [vmem:[%s0 + $0x78] sm:$0xff]
  %v32 = vld [vmem:[%s0 + $0x80] sm:$0xff]
  %v33 = vld [vmem:[%s0 + $0x88] sm:$0xff]
  %v34 = vld [vmem:[%s0 + $0x90] sm:$0xff]
  %v35 = vld [vmem:[%s0 + $0x98] sm:$0xff]
  %v36 = vld [vmem:[%s0 + $0xa0] sm:$0xff]
  %v37 = vld [vmem:[%s0 + $0xa8] sm:$0xff]
  %v38 = vld [vmem:[%s0 + $0xb0] sm:$0xff]
  %v39 = vld [vmem:[%s0 + $0xb8] sm:$0xff]
  %v40 = vld [vmem:[%s0 + $0xc0] sm:$0xff]
  %v41 = vld [vmem:[%s0 + $0xc8] sm:$0xff]
  %v42 = vld [vmem:[%s0 + $0xd0] sm:$0xff]
  %v43 = vld [vmem:[%s0 + $0xd8] sm:$0xff]
  %v44 = vld [vmem:[%s0 + $0xe0] sm:$0xff]
  %v45 = vld [vmem:[%s0 + $0xe8] sm:$0xff]
  %v46 = vld [vmem:[%s0 + $0xf0] sm:$0xff]
  %v47 = vld [vmem:[%s0 + $0xf8] sm:$0xff]
  %v48 = vld [vmem:[%s0 + $0x100] sm:$0xff]
  %v49 = vld [vmem:[%s0 + $0x108] sm:$0xff]
  %v50 = vld [vmem:[%s0 + $0x110] sm:$0xff]
  %v51 = vld [vmem:[%s0 + $0x118] sm:$0xff]
  %v52 = vld [vmem:[%s0 + $0x120] sm:$0xff]
  %v53 = vld [vmem:[%s0 + $0x128] sm:$0xff]
  %v54 = vld [vmem:[%s0 + $0x130] sm:$0xff]
  %v55 = vld [vmem:[%s0 + $0x138] sm:$0xff]
  %v56 = vld [vmem:[%s0 + $0x140] sm:$0xff]
  %v57 = vld [vmem:[%s0 + $0x148] sm:$0xff]
  %v58 = vld [vmem:[%s0 + $0x150] sm:$0xff]
  %v59 = vld [vmem:[%s0 + $0x158] sm:$0xff]
  %v60 = vld [vmem:[%s0 + $0x160] sm:$0xff]
  %v61 = vld [vmem:[%s0 + $0x168] sm:$0xff]
  %v62 = vld [vmem:[%s0 + $0x170] sm:$0xff]
  %v63 = vld [vmem:[%s0 + $0x178] sm:$0xff]
  %v64 = vld [vmem:[%s0 + $0x180] sm:$0xff]
  %v65 = vld [vmem:[%s0 + $0x188] sm:$0xff]
  %v66 = vld [vmem:[%s0 + $0x190] sm:$0xff]
  %v67 = vld [vmem:[%s0 + $0x198] sm:$0xff]
  %v68 = vld [vmem:[%s0 + $0x1a0] sm:$0xf]
  %v69 = vld [vmem:[%s0 + $0x1a8] sm:$0xf]
  %v70 = vld [vmem:[%s0 + $0x1b0] sm:$0xf]
  %v71 = vld [vmem:[%s0 + $0x1b8] sm:$0xf]
  %v72 = vld [vmem:[%s2] sm:$0xff]
  %v73 = vld [vmem:[%s2 + $0x8] sm:$0xff]
  %75 = vset.pattern.permute.xlu0 0
  %76 = vperm.xlu0 %75, %v72
  %v77 = vpop.permute.xlu0 %76
  %80 = vset.pattern.permute.xlu0 0
  %81 = vperm.xlu0 %80, %v73
  %v82 = vpop.permute.xlu0 %81
  %vm84 = vcmask 883712
  %v86 = vsel %vm84, %v14, 0
  %v89 = vsel %vm84, %v15, 0
  %vm91 = vcmask 1043456
  %v93 = vsel %vm91, %v68, 0
  %v96 = vsel %vm91, %v69, 0
  %v99 = vsel %vm91, %v70, 0
  %v102 = vsel %vm91, %v71, 0
  %104 = vmatprep.subr.mxu0 %v17
  %105 = vmatpush1.msra.mxu0 %v16
  %106 = vmatprep.subr.mxu0 %v21
  %107 = vmatpush1.msra.mxu0 %v20
  %108 = vmatprep.subr.mxu0 %v25
  %109 = vmatpush1.msra.mxu0 %v24
  %110 = vmatprep.subr.mxu0 %v29
  %111 = vmatpush1.msra.mxu0 %v28
  %112 = vmatprep.subr.mxu0 %v33
  %113 = vmatpush1.msra.mxu0 %v32
  %114 = vmatprep.subr.mxu0 %v37
  %115 = vmatpush1.msra.mxu0 %v36
  %116 = vmatprep.subr.mxu0 %v41
  %117 = vmatpush1.msra.mxu0 %v40
  %118 = vmatprep.subr.mxu0 %v45
  %119 = vmatpush1.msra.mxu0 %v44
  %120 = vmatprep.subr.mxu0 %v49
  %121 = vmatpush1.msra.mxu0 %v48
  %122 = vmatprep.subr.mxu0 %v53
  %123 = vmatpush1.msra.mxu0 %v52
  %124 = vmatprep.subr.mxu0 %v57
  %125 = vmatpush1.msra.mxu0 %v56
  %126 = vmatprep.subr.mxu0 %v61
  %127 = vmatpush1.msra.mxu0 %v60
  %128 = vmatprep.subr.mxu0 %v65
  %129 = vmatpush1.msra.mxu0 %v64
  %130 = vmatprep.subr.mxu0 %v96
  %131 = vmatpush1.msra.mxu0 %v93
  %132 = vmatprep.subr.mxu0 0.0
  %133 = vmatpush1.msra.mxu0 0.0
  %134 = vmatprep.subr.mxu0 0.0
  %135 = vmatpush1.msra.mxu0 0.0
  %136 = vmatprep.subr.mxu0 0.0
  %137 = vmatpush1.msra.mxu0 0.0
  %138 = vmatprep.subr.mxu0 0.0
  %139 = vmatpush1.msra.mxu0 0.0
  %140 = vmatprep.subr.mxu0 0.0
  %141 = vmatpush1.msra.mxu0 0.0
  %142 = vmatprep.subr.mxu0 0.0
  %143 = vmatpush1.msra.mxu0 0.0
  %144 = vmatprep.subr.mxu0 0.0
  %145 = vmatpush1.msra.mxu0 0.0
  %146 = vmatprep.subr.mxu0 0.0
  %147 = vmatpush1.msra.mxu0 0.0
  %148 = vmatprep.subr.mxu0 0.0
  %149 = vmatpush1.msra.mxu0 0.0
  %150 = vmatprep.subr.mxu0 0.0
  %151 = vmatpush1.msra.mxu0 0.0
  %152 = vmatprep.subr.mxu0 0.0
  %153 = vmatpush1.msra.mxu0 0.0
  %154 = vmatprep.subr.mxu0 0.0
  %155 = vmatpush1.msra.mxu0 0.0
  %156 = vmatprep.subr.mxu0 0.0
  %157 = vmatpush1.msra.mxu0 0.0
  %158 = vmatprep.subr.mxu0 0.0
  %159 = vmatpush1.msra.mxu0 0.0
  %160 = vmatprep.subr.mxu0 0.0
  %161 = vmatpush1.msra.mxu0 0.0
  %162 = vmatprep.subr.mxu0 0.0
  %163 = vmatpush1.msra.mxu0 0.0
  %164 = vmatprep.subr.mxu0 0.0
  %165 = vmatpush1.msra.mxu0 0.0
  %166 = vmatprep.subr.mxu0 0.0
  %167 = vmatpush1.msra.mxu0 0.0
  %168 = vmatprep.mubr.f32.mxu0 0.0
  %169 = vmatmul.mubr.f32.gmra.mrb[0].mxu0 %v86
  %v170 = vpop.f32.mrb[0].mxu0
  %v171 = vadd.f32 %v77, %v170
  %v172 = vpop.f32.mrb[0].mxu0
  %v173 = vadd.f32 %v77, %v172
  %174 = vmatprep.mubr.f32.mxu0 0.0
  %175 = vmatmul.mubr.f32.gmra.mrb[0].mxu0 %v89
  %v176 = vpop.f32.mrb[0].mxu0
  %v177 = vadd.f32 %v82, %v176
  %v178 = vpop.f32.mrb[0].mxu0
  %v179 = vadd.f32 %v82, %v178
  %180 = vdwg.mxu0
  %181 = vmatprep.subr.mxu0 %v19
  %182 = vmatpush1.msra.mxu0 %v18
  %183 = vmatprep.subr.mxu0 %v23
  %184 = vmatpush1.msra.mxu0 %v22
  %185 = vmatprep.subr.mxu0 %v27
  %186 = vmatpush1.msra.mxu0 %v26
  %187 = vmatprep.subr.mxu0 %v31
  %188 = vmatpush1.msra.mxu0 %v30
  %189 = vmatprep.subr.mxu0 %v35
  %190 = vmatpush1.msra.mxu0 %v34
  %191 = vmatprep.subr.mxu0 %v39
  %192 = vmatpush1.msra.mxu0 %v38
  %193 = vmatprep.subr.mxu0 %v43
  %194 = vmatpush1.msra.mxu0 %v42
  %195 = vmatprep.subr.mxu0 %v47
  %196 = vmatpush1.msra.mxu0 %v46
  %197 = vmatprep.subr.mxu0 %v51
  %198 = vmatpush1.msra.mxu0 %v50
  %199 = vmatprep.subr.mxu0 %v55
  %200 = vmatpush1.msra.mxu0 %v54
  %201 = vmatprep.subr.mxu0 %v59
  %202 = vmatpush1.msra.mxu0 %v58
  %203 = vmatprep.subr.mxu0 %v63
  %204 = vmatpush1.msra.mxu0 %v62
  %205 = vmatprep.subr.mxu0 %v67
  %206 = vmatpush1.msra.mxu0 %v66
  %207 = vmatprep.subr.mxu0 %v102
  %208 = vmatpush1.msra.mxu0 %v99
  %209 = vmatprep.subr.mxu0 0.0
  %210 = vmatpush1.msra.mxu0 0.0
  %211 = vmatprep.subr.mxu0 0.0
  %212 = vmatpush1.msra.mxu0 0.0
  %213 = vmatprep.subr.mxu0 0.0
  %214 = vmatpush1.msra.mxu0 0.0
  %215 = vmatprep.subr.mxu0 0.0
  %216 = vmatpush1.msra.mxu0 0.0
  %217 = vmatprep.subr.mxu0 0.0
  %218 = vmatpush1.msra.mxu0 0.0
  %219 = vmatprep.subr.mxu0 0.0
  %220 = vmatpush1.msra.mxu0 0.0
  %221 = vmatprep.subr.mxu0 0.0
  %222 = vmatpush1.msra.mxu0 0.0
  %223 = vmatprep.subr.mxu0 0.0
  %224 = vmatpush1.msra.mxu0 0.0
  %225 = vmatprep.subr.mxu0 0.0
  %226 = vmatpush1.msra.mxu0 0.0
  %227 = vmatprep.subr.mxu0 0.0
  %228 = vmatpush1.msra.mxu0 0.0
  %229 = vmatprep.subr.mxu0 0.0
  %230 = vmatpush1.msra.mxu0 0.0
  %231 = vmatprep.subr.mxu0 0.0
  %232 = vmatpush1.msra.mxu0 0.0
  %233 = vmatprep.subr.mxu0 0.0
  %234 = vmatpush1.msra.mxu0 0.0
  %235 = vmatprep.subr.mxu0 0.0
  %236 = vmatpush1.msra.mxu0 0.0
  %237 = vmatprep.subr.mxu0 0.0
  %238 = vmatpush1.msra.mxu0 0.0
  %239 = vmatprep.subr.mxu0 0.0
  %240 = vmatpush1.msra.mxu0 0.0
  %241 = vmatprep.subr.mxu0 0.0
  %242 = vmatpush1.msra.mxu0 0.0
  %243 = vmatprep.subr.mxu0 0.0
  %244 = vmatpush1.msra.mxu0 0.0
  %245 = vmatprep.mubr.f32.mxu0 0.0
  %246 = vmatmul.mubr.f32.gmra.mrb[0].mxu0 %v86
  %v247 = vpop.f32.mrb[0].mxu0
  %v248 = vadd.f32 %v77, %v247
  %v249 = vpop.f32.mrb[0].mxu0
  %v250 = vadd.f32 %v77, %v249
  %251 = vmatprep.mubr.f32.mxu0 0.0
  %252 = vmatmul.mubr.f32.gmra.mrb[0].mxu0 %v89
  %v253 = vpop.f32.mrb[0].mxu0
  %v254 = vadd.f32 %v82, %v253
  %v255 = vpop.f32.mrb[0].mxu0
  %v256 = vadd.f32 %v82, %v255
  %257 = vdwg.mxu0
  %v258 = vmax.f32 %v171, 0.0
  %v259 = vmax.f32 %v173, 0.0
  %v260 = vmax.f32 %v248, 0.0
  %v261 = vmax.f32 %v250, 0.0
  %v262 = vmax.f32 %v177, 0.0
  %v263 = vmax.f32 %v179, 0.0
  %v264 = vmax.f32 %v254, 0.0
  %v265 = vmax.f32 %v256, 0.0
  %266 = vst [vmem:[%s3] sm:$0xff] %v258
  %267 = vst [vmem:[%s3 + $0x8] sm:$0xff] %v259
  %268 = vst [vmem:[%s3 + $0x10] sm:$0xff] %v260
  %269 = vst [vmem:[%s3 + $0x18] sm:$0xff] %v261
  %270 = vst [vmem:[%s3 + $0x20] sm:$0xff] %v262
  %271 = vst [vmem:[%s3 + $0x28] sm:$0xff] %v263
  %272 = vst [vmem:[%s3 + $0x30] sm:$0xff] %v264
  %273 = vst [vmem:[%s3 + $0x38] sm:$0xff] %v265
  // Predicated region
  $region14: #{layer_forward.1} parent=0 // pred_check
    _
  $region15: #{layer_forward.1} parent=0 // pred_check_branch
    %275 = sbr.rel (0) target = $region17
  $region16: #{layer_forward.1} parent=0 // pred_region
    _
  $region17: #{layer_forward.1} parent=0 // pred_fallthru
    _
  // Predicated region
  $region18: #{layer_forward.1} parent=0 // pred_check
    _
  $region19: #{layer_forward.1} parent=0 // pred_check_branch
    %277 = sbr.rel (0) target = $region21
  $region20: #{layer_forward.1} parent=0 // pred_region
    _
  $region21: #{layer_forward.1} parent=0 // pred_fallthru
    _

</llo_original>
